<compile_context>
chip_gen: v5e
topology: v5e:2x2
jax: 0.10.0
libtpu: 0.0.40
codegen_flags: <defaults>
</compile_context>

<pallas_src>
import math

import jax
import jax.numpy as jnp
from jax.experimental import pallas as pl
from jax.experimental.pallas import tpu as pltpu

TIME_CHANNELS = 128   # SimpleUNet uses n_channels * 4 = 32 * 4


def _round_up(x, m):
    return ((x + m - 1) // m) * m


# ----------------------------- fused Pallas kernel ----------------------------------------
def _time_embedding_kernel(t_ref, freq_ref, phase_ref,
                           w1_ref, b1_ref, w2_ref, b2_ref, o_ref):
    # t_ref: (Bp, 1) f32; freq/phase: (1, F) f32; w1: (F, D) bf16; w2: (D, D) bf16
    t = t_ref[...]                                        # (Bp, 1)
    arg = t * freq_ref[...] + phase_ref[...]              # (Bp, F) broadcast
    emb = jnp.sin(arg)                                    # == [sin | cos] of t * freqs

    # lin1 + Swish (bf16 operands, fp32 accumulate / epilogue)
    h = jnp.dot(emb.astype(jnp.bfloat16), w1_ref[...],
                preferred_element_type=jnp.float32) + b1_ref[...]
    h = h * (1.0 / (1.0 + jnp.exp(-h)))                   # Swish in fp32

    # lin2
    out = jnp.dot(h.astype(jnp.bfloat16), w2_ref[...],
                  preferred_element_type=jnp.float32) + b2_ref[...]
    o_ref[...] = out


def time_embedding_forward(params, t):
    """t: (B,) float. Returns (B, time_channels) float32."""
    B = t.shape[0]
    F = params["freq"].shape[1]          # time_channels // 4
    D = params["w2t"].shape[1]           # time_channels

    Bp = max(8, _round_up(B, 8))
    t_p = jnp.pad(t.astype(jnp.float32).reshape(B, 1), ((0, Bp - B), (0, 0)))

    out = pl.pallas_call(
        _time_embedding_kernel,
        out_shape=jax.ShapeDtypeStruct((Bp, D), jnp.float32),
        grid=(1,),
        in_specs=[
            pl.BlockSpec((Bp, 1), lambda i: (0, 0)),   # t
            pl.BlockSpec((1, F), lambda i: (0, 0)),    # freqs (duplicated for sin|cos)
            pl.BlockSpec((1, F), lambda i: (0, 0)),    # phase (0 | pi/2)
            pl.BlockSpec((F, D), lambda i: (0, 0)),    # w1^T (bf16)
            pl.BlockSpec((1, D), lambda i: (0, 0)),    # b1
            pl.BlockSpec((D, D), lambda i: (0, 0)),    # w2^T (bf16)
            pl.BlockSpec((1, D), lambda i: (0, 0)),    # b2
        ],
        out_specs=pl.BlockSpec((Bp, D), lambda i: (0, 0)),
        compiler_params=pltpu.CompilerParams(dimension_semantics=("arbitrary",)),
    )(t_p, params["freq"], params["phase"],
      params["w1t"], params["b1"], params["w2t"], params["b2"])
    return out[:B]


# ----------------------------- parameter / constant preparation ---------------------------
def init_time_embedding_params(key, time_channels=TIME_CHANNELS):
    """PyTorch nn.Linear default init, then one-time transpose + bf16 cast of weights and
    precomputation of the sinusoidal frequency / phase tables (no per-call weight prep)."""
    in1 = time_channels // 4
    k1, k2, k3, k4 = jax.random.split(key, 4)
    s1 = 1.0 / math.sqrt(in1)
    w1 = jax.random.uniform(k1, (time_channels, in1), jnp.float32, -s1, s1)
    b1 = jax.random.uniform(k2, (time_channels,), jnp.float32, -s1, s1)
    s2 = 1.0 / math.sqrt(time_channels)
    w2 = jax.random.uniform(k3, (time_channels, time_channels), jnp.float32, -s2, s2)
    b2 = jax.random.uniform(k4, (time_channels,), jnp.float32, -s2, s2)

    half = time_channels // 8
    coef = math.log(10000.0) / (half - 1)
    freqs = jnp.exp(jnp.arange(half, dtype=jnp.float32) * -coef)
    freq_full = jnp.concatenate([freqs, freqs]).reshape(1, 2 * half)
    phase = jnp.concatenate([jnp.zeros((half,), jnp.float32),
                             jnp.full((half,), 0.5 * math.pi, jnp.float32)]
                            ).reshape(1, 2 * half)

    params = {
        "w1t": w1.T.astype(jnp.bfloat16),            # (in1, D)
        "b1": b1.reshape(1, time_channels),          # fp32
        "w2t": w2.T.astype(jnp.bfloat16),            # (D, D)
        "b2": b2.reshape(1, time_channels),          # fp32
        "freq": freq_full,                           # (1, D//4)
        "phase": phase,                              # (1, D//4)
    }
    # keep original fp32 weights around only for the reference check below
    ref = {"w1": w1, "b1": b1, "w2": w2, "b2": b2}
    return params, ref


# ----------------------------- pure-JAX fp32 reference ------------------------------------
def time_embedding_reference(ref, t, time_channels=TIME_CHANNELS):
    half = time_channels // 8
    coef = math.log(10000.0) / (half - 1)
    freqs = jnp.exp(jnp.arange(half, dtype=jnp.float32) * -coef)
    emb = t.astype(jnp.float32)[:, None] * freqs[None, :]
    emb = jnp.concatenate([jnp.sin(emb), jnp.cos(emb)], axis=-1)
    h = emb @ ref["w1"].T + ref["b1"]
    h = h * jax.nn.sigmoid(h)
    return h @ ref["w2"].T + ref["b2"]


# ----------------------------- main --------------------------------------------------------
if __name__ == "__main__":
    key = jax.random.PRNGKey(0)
    params, ref_w = init_time_embedding_params(jax.random.fold_in(key, 1), TIME_CHANNELS)

    B = 2
    t = jax.random.uniform(jax.random.fold_in(key, 2), (B,), jnp.float32, 0.0, 1000.0)

    fwd = jax.jit(time_embedding_forward)
    out = jax.block_until_ready(fwd(params, t))

    assert out.shape == (B, TIME_CHANNELS), out.shape
    assert bool(jnp.all(jnp.isfinite(out)))

    # sanity check vs fp32 reference (bf16-weight matmul -> loose tolerance)
    ref_out = time_embedding_reference(ref_w, t, TIME_CHANNELS)
    max_err = float(jnp.max(jnp.abs(out - ref_out)))
    assert max_err < 5e-2, f"max abs error {max_err}"

    print("KERNEL_OK")
</pallas_src>

<mosaic_0001>
module attributes {stable_mosaic.version = 11 : i64} {
  func.func @_time_embedding_kernel(%arg0: i32, %arg1: memref<8x1xf32, #tpu.memory_space<vmem>>, %arg2: memref<1x32xf32, #tpu.memory_space<vmem>>, %arg3: memref<1x32xf32, #tpu.memory_space<vmem>>, %arg4: memref<32x128xbf16, #tpu.memory_space<vmem>>, %arg5: memref<1x128xf32, #tpu.memory_space<vmem>>, %arg6: memref<128x128xbf16, #tpu.memory_space<vmem>>, %arg7: memref<1x128xf32, #tpu.memory_space<vmem>>, %arg8: memref<8x128xf32, #tpu.memory_space<vmem>>) attributes {dimension_semantics = [#tpu.dimension_semantics<arbitrary>], iteration_bounds = array<i64: 1>, scalar_prefetch = 0 : i64, scratch_operands = 0 : i64, tpu.core_type = #tpu.core_type<tc>, window_params = [{pipeline_mode = #tpu.pipeline_mode<synchronous>, transform_indices = @transform_0, window_bounds = array<i64: 8, 1>}, {pipeline_mode = #tpu.pipeline_mode<synchronous>, transform_indices = @transform_1, window_bounds = array<i64: 1, 32>}, {pipeline_mode = #tpu.pipeline_mode<synchronous>, transform_indices = @transform_2, window_bounds = array<i64: 1, 32>}, {pipeline_mode = #tpu.pipeline_mode<synchronous>, transform_indices = @transform_3, window_bounds = array<i64: 32, 128>}, {pipeline_mode = #tpu.pipeline_mode<synchronous>, transform_indices = @transform_4, window_bounds = array<i64: 1, 128>}, {pipeline_mode = #tpu.pipeline_mode<synchronous>, transform_indices = @transform_5, window_bounds = array<i64: 128, 128>}, {pipeline_mode = #tpu.pipeline_mode<synchronous>, transform_indices = @transform_6, window_bounds = array<i64: 1, 128>}, {pipeline_mode = #tpu.pipeline_mode<synchronous>, transform_indices = @transform_7, window_bounds = array<i64: 8, 128>}]} {
    %c0 = arith.constant 0 : index
    %c0_0 = arith.constant 0 : index
    %0 = vector.load %arg1[%c0, %c0_0] : memref<8x1xf32, #tpu.memory_space<vmem>>, vector<8x1xf32>
    %c0_1 = arith.constant 0 : index
    %c0_2 = arith.constant 0 : index
    %1 = vector.load %arg2[%c0_1, %c0_2] : memref<1x32xf32, #tpu.memory_space<vmem>>, vector<1x32xf32>
    %2 = vector.broadcast %0 : vector<8x1xf32> to vector<8x32xf32>
    %3 = vector.broadcast %1 : vector<1x32xf32> to vector<8x32xf32>
    %4 = arith.mulf %2, %3 : vector<8x32xf32>
    %c0_3 = arith.constant 0 : index
    %c0_4 = arith.constant 0 : index
    %5 = vector.load %arg3[%c0_3, %c0_4] : memref<1x32xf32, #tpu.memory_space<vmem>>, vector<1x32xf32>
    %6 = vector.broadcast %5 : vector<1x32xf32> to vector<8x32xf32>
    %7 = arith.addf %4, %6 : vector<8x32xf32>
    %8 = math.sin %7 : vector<8x32xf32>
    %9 = arith.truncf %8 : vector<8x32xf32> to vector<8x32xbf16>
    %c0_5 = arith.constant 0 : index
    %c0_6 = arith.constant 0 : index
    %10 = vector.load %arg4[%c0_5, %c0_6] : memref<32x128xbf16, #tpu.memory_space<vmem>>, vector<32x128xbf16>
    %cst = arith.constant dense<0.000000e+00> : vector<8x128xf32>
    %11 = tpu.matmul %9, %10, %cst {dimension_numbers = #tpu.dot_dimension_numbers<[1], [0], [0], [1], [0, 0, 1, 1], [], []>} : vector<8x32xbf16>, vector<32x128xbf16>, vector<8x128xf32> -> vector<8x128xf32>
    %c0_7 = arith.constant 0 : index
    %c0_8 = arith.constant 0 : index
    %12 = vector.load %arg5[%c0_7, %c0_8] : memref<1x128xf32, #tpu.memory_space<vmem>>, vector<1x128xf32>
    %13 = vector.broadcast %12 : vector<1x128xf32> to vector<8x128xf32>
    %14 = arith.addf %11, %13 : vector<8x128xf32>
    %cst_9 = arith.constant 0.000000e+00 : f32
    %15 = vector.broadcast %cst_9 : f32 to vector<8x128xf32>
    %16 = arith.subf %15, %14 : vector<8x128xf32>
    %17 = math.exp %16 : vector<8x128xf32>
    %cst_10 = arith.constant 1.000000e+00 : f32
    %18 = vector.broadcast %cst_10 : f32 to vector<8x128xf32>
    %19 = arith.addf %18, %17 : vector<8x128xf32>
    %cst_11 = arith.constant 1.000000e+00 : f32
    %20 = vector.broadcast %cst_11 : f32 to vector<8x128xf32>
    %21 = arith.divf %20, %19 : vector<8x128xf32>
    %22 = arith.mulf %14, %21 : vector<8x128xf32>
    %23 = arith.truncf %22 : vector<8x128xf32> to vector<8x128xbf16>
    %c0_12 = arith.constant 0 : index
    %c0_13 = arith.constant 0 : index
    %24 = vector.load %arg6[%c0_12, %c0_13] : memref<128x128xbf16, #tpu.memory_space<vmem>>, vector<128x128xbf16>
    %cst_14 = arith.constant dense<0.000000e+00> : vector<8x128xf32>
    %25 = tpu.matmul %23, %24, %cst_14 {dimension_numbers = #tpu.dot_dimension_numbers<[1], [0], [0], [1], [0, 0, 1, 1], [], []>} : vector<8x128xbf16>, vector<128x128xbf16>, vector<8x128xf32> -> vector<8x128xf32>
    %c0_15 = arith.constant 0 : index
    %c0_16 = arith.constant 0 : index
    %26 = vector.load %arg7[%c0_15, %c0_16] : memref<1x128xf32, #tpu.memory_space<vmem>>, vector<1x128xf32>
    %27 = vector.broadcast %26 : vector<1x128xf32> to vector<8x128xf32>
    %28 = arith.addf %25, %27 : vector<8x128xf32>
    %c0_17 = arith.constant 0 : index
    %c0_18 = arith.constant 0 : index
    %29 = vector.load %arg8[%c0_17, %c0_18] : memref<8x128xf32, #tpu.memory_space<vmem>>, vector<8x128xf32>
    tpu.vector_store %arg8[%c0_17, %c0_18], %28 {strides = array<i32>} : memref<8x128xf32, #tpu.memory_space<vmem>>, vector<8x128xf32>,
    return
  }
  func.func @transform_0(%arg0: i32) -> (i32, i32) {
    %c0_i32 = arith.constant 0 : i32
    %c0_i32_0 = arith.constant 0 : i32
    %c0_i32_1 = arith.constant 0 : i32
    return %c0_i32, %c0_i32_0 : i32, i32
  }
  func.func @transform_1(%arg0: i32) -> (i32, i32) {
    %c0_i32 = arith.constant 0 : i32
    %c0_i32_0 = arith.constant 0 : i32
    %c0_i32_1 = arith.constant 0 : i32
    return %c0_i32, %c0_i32_0 : i32, i32
  }
  func.func @transform_2(%arg0: i32) -> (i32, i32) {
    %c0_i32 = arith.constant 0 : i32
    %c0_i32_0 = arith.constant 0 : i32
    %c0_i32_1 = arith.constant 0 : i32
    return %c0_i32, %c0_i32_0 : i32, i32
  }
  func.func @transform_3(%arg0: i32) -> (i32, i32) {
    %c0_i32 = arith.constant 0 : i32
    %c0_i32_0 = arith.constant 0 : i32
    %c0_i32_1 = arith.constant 0 : i32
    return %c0_i32, %c0_i32_0 : i32, i32
  }
  func.func @transform_4(%arg0: i32) -> (i32, i32) {
    %c0_i32 = arith.constant 0 : i32
    %c0_i32_0 = arith.constant 0 : i32
    %c0_i32_1 = arith.constant 0 : i32
    return %c0_i32, %c0_i32_0 : i32, i32
  }
  func.func @transform_5(%arg0: i32) -> (i32, i32) {
    %c0_i32 = arith.constant 0 : i32
    %c0_i32_0 = arith.constant 0 : i32
    %c0_i32_1 = arith.constant 0 : i32
    return %c0_i32, %c0_i32_0 : i32, i32
  }
  func.func @transform_6(%arg0: i32) -> (i32, i32) {
    %c0_i32 = arith.constant 0 : i32
    %c0_i32_0 = arith.constant 0 : i32
    %c0_i32_1 = arith.constant 0 : i32
    return %c0_i32, %c0_i32_0 : i32, i32
  }
  func.func @transform_7(%arg0: i32) -> (i32, i32) {
    %c0_i32 = arith.constant 0 : i32
    %c0_i32_0 = arith.constant 0 : i32
    %c0_i32_1 = arith.constant 0 : i32
    return %c0_i32, %c0_i32_0 : i32, i32
  }
}

</mosaic_0001>

<llo_original>
// kernel: time_embedding_forward.1
$region0: #{time_embedding_forward.1}
  #allocation0 [shape = 'u32[]', space=smem, size = 0x4, offset = 0x4, fixed_abs, tag = 'smem constant byte address 0x4 - core index']
  #allocation1 [shape = 'u32[72,128]{1,0:T(1,128)}', space=vmem, size = 0x9000, scoped, tag = 'internal scratch']
  %s0 = inlined_call_operand.vmem [shape: f32[8,1], index: 0, kind: input, shape index: {}]
  %s1 = inlined_call_operand.vmem [shape: f32[1,32], index: 1, kind: input, shape index: {}]
  %s2 = inlined_call_operand.vmem [shape: f32[1,32], index: 2, kind: input, shape index: {}]
  %s3 = inlined_call_operand.hbm [shape: bf16[32,128], index: 3, kind: input, shape index: {}]
  %s4 = inlined_call_operand.vmem [shape: f32[1,128], index: 4, kind: input, shape index: {}]
  %s5 = inlined_call_operand.hbm [shape: bf16[128,128], index: 5, kind: input, shape index: {}]
  %s6 = inlined_call_operand.vmem [shape: f32[1,128], index: 6, kind: input, shape index: {}]
  %s7 = inlined_call_operand.vmem [shape: f32[8,128], index: 7, kind: output, shape index: {}]
  %s8 = sld [smem:[#allocation0]]
  $region46: #{time_embedding_forward.1} parent=0
    _
  %s10 = ssub.s32 1, %s8
  %s11 = scalar_select 0, %s10, %s8
  $region1: #{time_embedding_forward.1} parent=0
    #allocation2 [shape = 'u8[8192]{0}', space=vmem, size = 0x2000, scoped, tag = 'input window, operand 3, single buffered']
    #allocation3 [shape = 's32[1]{0}', space=sflag, size = 0x4, scoped, tag = 'scoped memory for time_embedding_forward.1']
    #allocation4 [shape = 'u8[32768]{0}', space=vmem, size = 0x8000, scoped, tag = 'input window, operand 5, single buffered']
    #allocation5 [shape = 's32[1]{0}', space=sflag, size = 0x4, scoped, tag = 'scoped memory for time_embedding_forward.1']
    %12 = vsyncpa [#allocation3], 0
    %13 = vsyncpa [#allocation5], 0
    // Predicated region
    $region2: #{time_embedding_forward.1} parent=1 // pred_check
      _
    $region3: #{time_embedding_forward.1} parent=1 // pred_check_branch
      %15 = sbr.rel (0) target = $region5
    $region4: #{time_embedding_forward.1} parent=1 // pred_region
      _
    $region5: #{time_embedding_forward.1} parent=1 // pred_fallthru
      _
    // Predicated region
    $region6: #{time_embedding_forward.1} parent=1 // pred_check
      _
    $region7: #{time_embedding_forward.1} parent=1 // pred_check_branch
      %17 = sbr.rel (0) target = $region9
    $region8: #{time_embedding_forward.1} parent=1 // pred_region
      _
    $region9: #{time_embedding_forward.1} parent=1 // pred_fallthru
      _
    // Predicated region
    $region10: #{time_embedding_forward.1} parent=1 // pred_check
      _
    $region11: #{time_embedding_forward.1} parent=1 // pred_check_branch
      %19 = sbr.rel (0) target = $region13
    $region12: #{time_embedding_forward.1} parent=1 // pred_region
      _
    $region13: #{time_embedding_forward.1} parent=1 // pred_fallthru
      _
    // Predicated region
    $region14: #{time_embedding_forward.1} parent=1 // pred_check
      _
    $region15: #{time_embedding_forward.1} parent=1 // pred_check_branch
      %21 = sbr.rel (0) target = $region17
    $region16: #{time_embedding_forward.1} parent=1 // pred_region
      %23 = vsyncadd [#allocation3], 0
      %s24 = sshll.u32 %s3, 4
      %s25 = int_to_ptr.hbm [resolvable:$true] %s24
      %s26 = sshll.u32 [#allocation2], 4
      %s27 = int_to_ptr.vmem [resolvable:$true] %s26
      %32 = dma.hbm_to_vmem [thread:$0]  %s25, 256, %s27, [#allocation3], 64, 64, 4
    $region17: #{time_embedding_forward.1} parent=1 // pred_fallthru
      _
    // Predicated region
    $region18: #{time_embedding_forward.1} parent=1 // pred_check
      _
    $region19: #{time_embedding_forward.1} parent=1 // pred_check_branch
      %34 = sbr.rel (0) target = $region21
    $region20: #{time_embedding_forward.1} parent=1 // pred_region
      _
    $region21: #{time_embedding_forward.1} parent=1 // pred_fallthru
      _
    // Predicated region
    $region22: #{time_embedding_forward.1} parent=1 // pred_check
      _
    $region23: #{time_embedding_forward.1} parent=1 // pred_check_branch
      %36 = sbr.rel (0) target = $region25
    $region24: #{time_embedding_forward.1} parent=1 // pred_region
      %38 = vsyncadd [#allocation5], 0
      %s39 = sshll.u32 %s5, 4
      %s40 = int_to_ptr.hbm [resolvable:$true] %s39
      %s41 = sshll.u32 [#allocation4], 4
      %s42 = int_to_ptr.vmem [resolvable:$true] %s41
      %47 = dma.hbm_to_vmem [thread:$0]  %s40, 1024, %s42, [#allocation5], 64, 64, 4
    $region25: #{time_embedding_forward.1} parent=1 // pred_fallthru
      _
    // Predicated region
    $region26: #{time_embedding_forward.1} parent=1 // pred_check
      _
    $region27: #{time_embedding_forward.1} parent=1 // pred_check_branch
      %49 = sbr.rel (0) target = $region29
    $region28: #{time_embedding_forward.1} parent=1 // pred_region
      _
    $region29: #{time_embedding_forward.1} parent=1 // pred_fallthru
      _
    // Predicated region
    $region30: #{time_embedding_forward.1} parent=1 // pred_check
      _
    $region31: #{time_embedding_forward.1} parent=1 // pred_check_branch
      %51 = sbr.rel (0) target = $region33
    $region32: #{time_embedding_forward.1} parent=1 // pred_region
      %53 = dma.done [#allocation3], 256
    $region33: #{time_embedding_forward.1} parent=1 // pred_fallthru
      _
    // Predicated region
    $region34: #{time_embedding_forward.1} parent=1 // pred_check
      _
    $region35: #{time_embedding_forward.1} parent=1 // pred_check_branch
      %55 = sbr.rel (0) target = $region37
    $region36: #{time_embedding_forward.1} parent=1 // pred_region
      %57 = dma.done [#allocation5], 1024
    $region37: #{time_embedding_forward.1} parent=1 // pred_fallthru
      _
    %v59 = vld [vmem:[%s0] sm:$0xff]
    %v60 = vld [vmem:[%s1] sm:$0x1]
    %62 = vset.pattern.permute.xlu0 0
    %63 = vperm.xlu0 %62, %v59
    %v64 = vpop.permute.xlu0 %63
    %v67 = vperm.slane %v60, 0
    %v69 = vmul.f32 %v64, %v67
    %v70 = vld [vmem:[%s2] sm:$0x1]
    %v72 = vperm.slane %v70, 0
    %v74 = vadd.f32 %v69, %v72
    %v75 = vand.u32 2147483647, %v74
    %vm76 = vcmp.le.f32.partialorder %v75, 0.7853982
    %vm77 = vcmp.lt.s32.totalorder %v74, 0
    %v78 = vand.u32 %v74, 2139095040
    %v79 = vshrl.u32 %v78, 23
    %v80 = vsub.s32 %v79, 127
    %v81 = vand.u32 2147483647, %v74
    %v82 = vand.u32 %v81, 8388607
    %v83 = vor.u32 %v82, 8388608
    %v84 = vsub.s32 0, %v83
    %v85 = vadd.s32 %v80, 1
    %vm86 = vcmp.gt.s32.totalorder %v85, 0
    %v87 = vsel %vm86, %v85, 0
    %v88 = vshrl.u32 %v87, 5
    %v89 = vand.u32 %v87, 31
    %v90 = vsub.s32 32, %v89
    %v91 = vshrl.u32 683565275, %v90
    %v92 = vshll.u32 683565275, %v89
    %v93 = vshrl.u32 2475754826, %v90
    %v94 = vor.u32 %v92, %v93
    %v95 = vshll.u32 2475754826, %v89
    %v96 = vshrl.u32 2131351028, %v90
    %v97 = vor.u32 %v95, %v96
    %v98 = vshll.u32 2131351028, %v89
    %v99 = vshrl.u32 2102212464, %v90
    %v100 = vor.u32 %v98, %v99
    %v101 = vshll.u32 2102212464, %v89
    %v102 = vshrl.u32 920167782, %v90
    %v103 = vor.u32 %v101, %v102
    %v104 = vshll.u32 920167782, %v89
    %v105 = vshrl.u32 1326507024, %v90
    %v106 = vor.u32 %v104, %v105
    %vm107 = vcmp.lt.s32.totalorder %v88, 1
    %vm108 = vcmp.lt.s32.totalorder %v88, 2
    %vm109 = vcmp.lt.s32.totalorder %v88, 3
    %vm110 = vcmp.lt.s32.totalorder %v88, 4
    %v111 = vsel %vm107, %v91, %v94
    %v112 = vsel %vm110, %v100, 2102212464
    %v113 = vsel %vm109, %v97, %v112
    %v114 = vsel %vm108, %v111, %v113
    %v115 = vsel %vm107, %v94, %v97
    %v116 = vsel %vm110, %v103, 920167782
    %v117 = vsel %vm109, %v100, %v116
    %v118 = vsel %vm108, %v115, %v117
    %v119 = vsel %vm107, %v97, %v100
    %v120 = vsel %vm110, %v106, 1326507024
    %v121 = vsel %vm109, %v103, %v120
    %v122 = vsel %vm108, %v119, %v121
    %v123 = vshll.u32 %v83, 8
    %v124 = vand.u32 %v123, 65535
    %v125 = vshrl.u32 %v123, 16
    %v126 = vand.u32 %v122, 65535
    %v127 = vshrl.u32 %v122, 16
    %v128 = vmul.u32 %v124, %v126
    %v129 = vmul.u32 %v124, %v127
    %v130 = vmul.u32 %v125, %v126
    %v131 = vmul.u32 %v125, %v127
    %v132 = vshll.u32 %v129, 16
    %v133 = vshrl.u32 %v129, 16
    %v134 = vshll.u32 %v130, 16
    %v135 = vshrl.u32 %v130, 16
    %vm136 = vc.u32 %v128, %v132
    %v137 = vsel %vm136, 1, 0
    %v138 = vadd.s32 %v128, %v132
    %v139 = vadd.s32 %v131, %v137
    %vm140 = vc.u32 %v138, %v134
    %v141 = vsel %vm140, 1, 0
    %v142 = vadd.s32 %v138, %v134
    %v143 = vadd.s32 %v139, %v141
    %v144 = vadd.s32 %v143, %v133
    %v145 = vadd.s32 %v144, %v135
    %v146 = vand.u32 %v123, 65535
    %v147 = vshrl.u32 %v123, 16
    %v148 = vand.u32 %v118, 65535
    %v149 = vshrl.u32 %v118, 16
    %v150 = vmul.u32 %v146, %v148
    %v151 = vmul.u32 %v146, %v149
    %v152 = vmul.u32 %v147, %v148
    %v153 = vmul.u32 %v147, %v149
    %v154 = vshll.u32 %v151, 16
    %v155 = vshrl.u32 %v151, 16
    %v156 = vshll.u32 %v152, 16
    %v157 = vshrl.u32 %v152, 16
    %vm158 = vc.u32 %v150, %v154
    %v159 = vsel %vm158, 1, 0
    %v160 = vadd.s32 %v150, %v154
    %v161 = vadd.s32 %v153, %v159
    %vm162 = vc.u32 %v160, %v156
    %v163 = vsel %vm162, 1, 0
    %v164 = vadd.s32 %v160, %v156
    %v165 = vadd.s32 %v161, %v163
    %v166 = vadd.s32 %v165, %v155
    %v167 = vadd.s32 %v166, %v157
    %v168 = vmul.u32 %v123, %v114
    %v169 = vadd.s32 %v145, %v164
    %vm170 = vc.u32 %v145, %v164
    %v171 = vadd.s32 %v167, 1
    %v172 = vsel %vm170, %v171, %v167
    %v173 = vadd.s32 %v168, %v172
    %v174 = vadd.s32 %v173, 536870912
    %v175 = vshrl.u32 %v174, 30
    %v176 = vshll.u32 %v175, 30
    %v177 = vsub.s32 %v173, %v176
    %vm178 = vcmp.lt.s32.totalorder %v177, 0
    %v179 = vsub.s32 0, %v177
    %v180 = vsel %vm178, %v179, %v177
    %v181 = vclz %v180
    %v182 = vsub.s32 %v181, 2
    %vm183 = vcmp.gt.s32.totalorder 0, %v182
    %v184 = vsel %vm183, 0, %v182
    %v185 = vsub.s32 32, %v184
    %v186 = vshll.u32 %v177, %v184
    %v187 = vshrl.u32 %v169, %v185
    %v188 = vor.u32 %v186, %v187
    %v189 = vsub.s32 4294967266, %v184
    %v190 = vadd.s32 %v189, 127
    %v191 = vshll.u32 %v190, 23
    %v192 = vor.u32 4788187, %v191
    %v193 = vand.u32 2147483647, %v192
    %v195 = vcvt.s32.f32 %v188
    %v196 = vmul.f32 %v195, %v193
    %v197 = vxor.u32 %v196, 2147483648
    %v198 = vsel %vm77, %v197, %v196
    %v199 = vsub.s32 4, %v175
    %v200 = vsel %vm77, %v199, %v175
    %v201 = vsel %vm76, %v74, %v198
    %v202 = vsel %vm76, 0, %v200
    %v203 = vmul.f32 %v201, %v201
    %v204 = vmul.f32 %v203, -0.001358992
    %v205 = vadd.f32 %v204, 0.041655596
    %v206 = vmul.f32 %v203, %v205
    %v207 = vadd.f32 %v206, -0.4999988
    %v208 = vmul.f32 %v203, %v207
    %v209 = vadd.f32 1.0, %v208
    %v210 = vmul.f32 %v201, %v201
    %v211 = vmul.f32 %v210, -0.00019511016
    %v212 = vadd.f32 %v211, 0.008332121
    %v213 = vmul.f32 %v210, %v212
    %v214 = vadd.f32 %v213, -0.16666654
    %v215 = vmul.f32 %v210, %v214
    %v216 = vadd.f32 %v215, 1.0
    %v217 = vmul.f32 %v216, %v201
    %vm218 = vweird.f32 %v74
    %v219 = vadd.s32 %v202, 3
    %v220 = vand.u32 %v219, 3
    %vm221 = vcmp.lt.s32.totalorder %v220, 2
    %vm222 = vcmp.eq.s32.totalorder %v220, 0
    %v223 = vxor.u32 %v217, 2147483648
    %v224 = vsel %vm222, %v209, %v223
    %vm225 = vcmp.eq.s32.totalorder %v220, 2
    %v226 = vxor.u32 %v209, 2147483648
    %v227 = vsel %vm225, %v226, %v217
    %v228 = vsel %vm221, %v224, %v227
    %v229 = vsel %vm218, nan, %v228
    %v230 = vpack.c.bf16 %v229, %v229
    %v231 = vld [vmem:[#allocation2] sm:$0xf]
    %v232 = vld [vmem:[#allocation2 + $0x4] sm:$0xf]
    %v233 = vld [vmem:[#allocation2 + $0x8] sm:$0xf]
    %v234 = vld [vmem:[#allocation2 + $0xc] sm:$0xf]
    %v235 = vld [vmem:[%s4] sm:$0x1]
    %v237 = vperm.slane %v235, 0
    %v243 = vunpack.c.l.b16 %v231
    %v244 = vunpack.c.l.b16 %v232
    %v245 = vunpack.c.l.b16 %v233
    %v246 = vunpack.c.l.b16 %v234
    %v247 = vpack.c.b16 %v244, %v243
    %v248 = vpack.c.b16 %v246, %v245
    %vm251 = vcmask 261120
    %v253 = vsel %vm251, %v230, 0
    %255 = vmatpush.bf16.msra.mxu0 0
    %256 = vmatpush.bf16.msra.mxu0 0
    %257 = vmatpush.bf16.msra.mxu0 0
    %258 = vmatpush.bf16.msra.mxu0 0
    %259 = vmatpush.bf16.msra.mxu0 0
    %260 = vmatpush.bf16.msra.mxu0 0
    %261 = vmatpush.bf16.msra.mxu0 %v248
    %262 = vmatpush.bf16.msra.mxu0 %v247
    %263 = vmatmul.bf16.gmra.mxu0 %v253
    %v264 = vpop.f32.mrf.mxu0
    %v265 = vadd.f32 %v237, %v264
    %v266 = vpop.f32.mrf.mxu0
    %267 = vdwg.mxu0
    %v268 = vsub.f32 0.0, %v265
    %v269 = vmul.f32 %v268, 1.442695
    %v270 = vpow.pop %v269
    %v271 = vadd.f32 %v270, 1.0
    %v272 = vrcp.pop %v271
    %v273 = vmul.f32 %v271, %v272
    %v274 = vsub.f32 1.0, %v273
    %v275 = vmul.f32 %v272, %v274
    %v276 = vadd.f32 %v272, %v275
    %vm277 = vweird.f32 %v271
    %vm278 = vweird.f32 %v272
    %vm279 = vmor %vm277, %vm278
    %v280 = vsel %vm279, %v272, %v276
    %v281 = vand.u32 2147483647, %v271
    %vm282 = vcmp.eq.f32.partialorder %v281, 8.507059e+37
    %v283 = vand.u32 %v271, 2147483648
    %v284 = vor.u32 1.1754944e-38, %v283
    %v285 = vsel %vm282, %v284, %v280
    %v286 = vmul.f32 1.0, %v285
    %v287 = vmul.f32 %v265, %v286
    %v288 = vpack.c.bf16 %v287, %v287
    %v289 = vld [vmem:[#allocation4] sm:$0xf]
    %v290 = vld [vmem:[#allocation4 + $0x4] sm:$0xf]
    %v291 = vld [vmem:[#allocation4 + $0x8] sm:$0xf]
    %v292 = vld [vmem:[#allocation4 + $0xc] sm:$0xf]
    %v293 = vld [vmem:[#allocation4 + $0x10] sm:$0xf]
    %v294 = vld [vmem:[#allocation4 + $0x14] sm:$0xf]
    %v295 = vld [vmem:[#allocation4 + $0x18] sm:$0xf]
    %v296 = vld [vmem:[#allocation4 + $0x1c] sm:$0xf]
    %v297 = vld [vmem:[#allocation4 + $0x20] sm:$0xf]
    %v298 = vld [vmem:[#allocation4 + $0x24] sm:$0xf]
    %v299 = vld [vmem:[#allocation4 + $0x28] sm:$0xf]
    %v300 = vld [vmem:[#allocation4 + $0x2c] sm:$0xf]
    %v301 = vld [vmem:[#allocation4 + $0x30] sm:$0xf]
    %v302 = vld [vmem:[#allocation4 + $0x34] sm:$0xf]
    %v303 = vld [vmem:[#allocation4 + $0x38] sm:$0xf]
    %v304 = vld [vmem:[#allocation4 + $0x3c] sm:$0xf]
    %v305 = vld [vmem:[%s6] sm:$0x1]
    %v307 = vperm.slane %v305, 0
    %v325 = vunpack.c.l.b16 %v289
    %v326 = vunpack.c.l.b16 %v290
    %v327 = vunpack.c.l.b16 %v291
    %v328 = vunpack.c.l.b16 %v292
    %v329 = vunpack.c.l.b16 %v293
    %v330 = vunpack.c.l.b16 %v294
    %v331 = vunpack.c.l.b16 %v295
    %v332 = vunpack.c.l.b16 %v296
    %v333 = vunpack.c.l.b16 %v297
    %v334 = vunpack.c.l.b16 %v298
    %v335 = vunpack.c.l.b16 %v299
    %v336 = vunpack.c.l.b16 %v300
    %v337 = vunpack.c.l.b16 %v301
    %v338 = vunpack.c.l.b16 %v302
    %v339 = vunpack.c.l.b16 %v303
    %v340 = vunpack.c.l.b16 %v304
    %v341 = vpack.c.b16 %v326, %v325
    %v342 = vpack.c.b16 %v328, %v327
    %v343 = vpack.c.b16 %v330, %v329
    %v344 = vpack.c.b16 %v332, %v331
    %v345 = vpack.c.b16 %v334, %v333
    %v346 = vpack.c.b16 %v336, %v335
    %v347 = vpack.c.b16 %v338, %v337
    %v348 = vpack.c.b16 %v340, %v339
    %357 = vmatpush.bf16.msra.mxu0 %v348
    %358 = vmatpush.bf16.msra.mxu0 %v347
    %359 = vmatpush.bf16.msra.mxu0 %v346
    %360 = vmatpush.bf16.msra.mxu0 %v345
    %361 = vmatpush.bf16.msra.mxu0 %v344
    %362 = vmatpush.bf16.msra.mxu0 %v343
    %363 = vmatpush.bf16.msra.mxu0 %v342
    %364 = vmatpush.bf16.msra.mxu0 %v341
    %365 = vmatmul.bf16.gmra.mxu0 %v288
    %v366 = vpop.f32.mrf.mxu0
    %v367 = vadd.f32 %v307, %v366
    %v368 = vpop.f32.mrf.mxu0
    %369 = vdwg.mxu0
    %370 = vst [vmem:[%s7] sm:$0xff] %v367
    // Predicated region
    $region38: #{time_embedding_forward.1} parent=1 // pred_check
      _
    $region39: #{time_embedding_forward.1} parent=1 // pred_check_branch
      %372 = sbr.rel (0) target = $region41
    $region40: #{time_embedding_forward.1} parent=1 // pred_region
      _
    $region41: #{time_embedding_forward.1} parent=1 // pred_fallthru
      _
    // Predicated region
    $region42: #{time_embedding_forward.1} parent=1 // pred_check
      _
    $region43: #{time_embedding_forward.1} parent=1 // pred_check_branch
      %374 = sbr.rel (0) target = $region45
    $region44: #{time_embedding_forward.1} parent=1 // pred_region
      _
    $region45: #{time_embedding_forward.1} parent=1 // pred_fallthru
      _
    %375 = vsyncpa [#allocation3], 1
    %376 = vsyncpa [#allocation5], 1

</llo_original>
